<compile_context>
chip_gen: v7x
topology: tpu7x:2x2x1
jax: 0.10.0
libtpu: 0.0.40
codegen_flags: <defaults>
</compile_context>

<pallas_src>
import functools

import jax
import jax.numpy as jnp
from jax.experimental import pallas as pl
from jax.experimental.pallas import tpu as pltpu

LN_EPS = 1e-5


def _round_up(x, m):
    return (x + m - 1) // m * m


def _cdiv(a, b):
    return -(-a // b)


def rnn_cell_kernel(x_ref, h_ref, w_ih_ref, w_hh_ref, b_ref, gamma_ref, beta_ref,
                    o_ref, *, true_h):
    # x_ref:     (TB, I)   input batch tile (f32; last tile may contain garbage rows)
    # h_ref:     (TB, H)   hidden batch tile (f32)
    # w_ih_ref:  (I,  Hp)  Linear weight, input slice  (bf16 or f32; lanes >= true_h are 0)
    # w_hh_ref:  (H,  Hp)  Linear weight, hidden slice
    # b/gamma/beta: (1, Hp) zero-padded f32 params
    # o_ref:     (TB, Hp)  lane-dense output (padded lanes come out 0)
    cdt = w_ih_ref.dtype
    x = x_ref[...].astype(cdt)
    h = h_ref[...].astype(cdt)

    # Fused "concat -> Linear": split dot instead of materializing the concat.
    # bf16 operands + f32 accumulation run at the MXU's native rate.
    y = jnp.dot(x, w_ih_ref[...], preferred_element_type=jnp.float32)
    y = y + jnp.dot(h, w_hh_ref[...], preferred_element_type=jnp.float32)
    y = y + b_ref[...]

    # LayerNorm over the true H lanes. Padded lanes of y are exactly 0 (zero-padded
    # weights/bias), so the plain sums already equal the sums over the true lanes:
    # no iota/where mask needed (sum-of-squares form).
    inv_h = 1.0 / float(true_h)
    s1 = jnp.sum(y, axis=-1, keepdims=True)
    s2 = jnp.sum(y * y, axis=-1, keepdims=True)
    mean = s1 * inv_h
    var = jnp.maximum(s2 * inv_h - mean * mean, 0.0)   # guard tiny negative cancellation
    y_norm = (y - mean) * jax.lax.rsqrt(var + LN_EPS)
    # Padded gamma/beta are 0 -> padded output lanes are exactly 0.
    y_ln = y_norm * gamma_ref[...] + beta_ref[...]

    # ReLU; Dropout is identity in eval mode.
    # TODO(synk): training-mode dropout would use pltpu.prng_seed + pltpu.prng_random_bits
    # to build the keep mask in-kernel.
    o_ref[...] = jnp.maximum(y_ln, 0.0).astype(o_ref.dtype)


def prepare_rnn_cell_params(w, b, gamma, beta, input_size, compute_dtype=jnp.bfloat16):
    """One-time parameter preprocessing (call once, NOT per timestep).

    w: (I+H, H) Linear weight in x @ W layout; b/gamma/beta: (H,).
    Splits the weight for concat fusion, zero-pads the feature dim to a lane multiple,
    and casts the matmul weights to `compute_dtype` (bf16 by default).
    """
    D, H = w.shape
    I = int(input_size)
    assert D == I + H
    Hp = _round_up(H, 128)                 # lane-dense output / full MXU columns

    w_ih = jnp.zeros((I, Hp), compute_dtype).at[:, :H].set(w[:I, :].astype(compute_dtype))
    w_hh = jnp.zeros((H, Hp), compute_dtype).at[:, :H].set(w[I:, :].astype(compute_dtype))
    b_p = jnp.zeros((1, Hp), jnp.float32).at[:, :H].set(b.reshape(1, H).astype(jnp.float32))
    gamma_p = jnp.zeros((1, Hp), jnp.float32).at[:, :H].set(gamma.reshape(1, H).astype(jnp.float32))
    beta_p = jnp.zeros((1, Hp), jnp.float32).at[:, :H].set(beta.reshape(1, H).astype(jnp.float32))
    return dict(w_ih=w_ih, w_hh=w_hh, b=b_p, gamma=gamma_p, beta=beta_p,
                hidden_size=H, input_size=I)


def rnn_cell_forward(inp, hidden, params, *, block_b=512):
    """inp: (B, I) f32, hidden: (B, H) f32, params from prepare_rnn_cell_params -> (B, H)."""
    B, I = inp.shape
    H = int(params["hidden_size"])
    assert I == int(params["input_size"])
    assert hidden.shape == (B, H)
    Hp = params["w_ih"].shape[-1]

    # Batch tile: as large as block_b allows; partial last tile handled by Pallas
    # (row-wise LN -> garbage rows never affect valid rows; their stores are masked).
    tb = min(block_b, _round_up(B, 8))
    # Guarantee >= 2 grid steps when the batch permits, so the "parallel" axis can
    # shard across v7x's two TensorCores (no effect on 1-TC v5e/v6e).
    if _cdiv(B, tb) == 1 and B >= 16:
        tb = _round_up(_cdiv(B, 2), 8)
    grid_b = _cdiv(B, tb)

    # VMEM budget: double-buffered streaming blocks + resident (weight-stationary) params.
    # TODO(synk): pipeline_mode=pl.Buffered(1) on the constant-index weight specs would
    # single-buffer them (halves resident-weight VMEM on v7x); left at default for safety.
    w_bytes = params["w_ih"].dtype.itemsize
    stream_bytes = (tb * I + tb * H + tb * Hp) * 4 * 2
    param_bytes = (I * Hp + H * Hp) * w_bytes * 2 + 3 * Hp * 4 * 2
    needed = stream_bytes + param_bytes + (4 << 20)
    try:
        vmem_cap = int(pltpu.get_tpu_info().vmem_capacity_bytes)
    except Exception:
        vmem_cap = 64 << 20                                  # safe on every generation
    vmem_limit = int(min(max(needed, 32 << 20), vmem_cap - (16 << 20)))

    out_padded = pl.pallas_call(
        functools.partial(rnn_cell_kernel, true_h=H),
        out_shape=jax.ShapeDtypeStruct((B, Hp), jnp.float32),
        grid_spec=pltpu.PrefetchScalarGridSpec(
            num_scalar_prefetch=0,
            grid=(grid_b,),
            in_specs=[
                pl.BlockSpec((tb, I), lambda i: (i, 0)),
                pl.BlockSpec((tb, H), lambda i: (i, 0)),
                pl.BlockSpec((I, Hp), lambda i: (0, 0)),   # weight-stationary
                pl.BlockSpec((H, Hp), lambda i: (0, 0)),   # weight-stationary
                pl.BlockSpec((1, Hp), lambda i: (0, 0)),
                pl.BlockSpec((1, Hp), lambda i: (0, 0)),
                pl.BlockSpec((1, Hp), lambda i: (0, 0)),
            ],
            out_specs=pl.BlockSpec((tb, Hp), lambda i: (i, 0)),
        ),
        compiler_params=pltpu.CompilerParams(
            dimension_semantics=("parallel",),
            vmem_limit_bytes=vmem_limit,
        ),
    )(inp, hidden, params["w_ih"], params["w_hh"], params["b"], params["gamma"], params["beta"])

    # Cheap lane slice only (no batch re-slice needed); preserves the (B, H) contract.
    # TODO(synk): for very large H (f32 weights > ~half of v7x VMEM), add an Hp column
    # tiling grid axis with a two-pass / stats-accumulating LayerNorm.
    return out_padded if Hp == H else out_padded[:, :H]


def reference_forward(inp, hidden, w, b, gamma, beta):
    combined = jnp.concatenate([inp, hidden], axis=-1)
    y = combined @ w + b
    mean = jnp.mean(y, axis=-1, keepdims=True)
    var = jnp.mean((y - mean) ** 2, axis=-1, keepdims=True)
    y = (y - mean) / jnp.sqrt(var + LN_EPS) * gamma + beta
    return jnp.maximum(y, 0.0)


if __name__ == "__main__":
    B = 8
    input_size = 32
    hidden_size = 32
    D = input_size + hidden_size

    key = jax.random.PRNGKey(0)
    k_in, k_h, k_w, k_b = jax.random.split(key, 4)

    inp = jax.random.normal(k_in, (B, input_size), dtype=jnp.float32)
    hidden = jax.random.normal(k_h, (B, hidden_size), dtype=jnp.float32)

    # Deterministic parameter init (PyTorch Linear-like uniform bound).
    bound = 1.0 / (D ** 0.5)
    w = jax.random.uniform(k_w, (D, hidden_size), jnp.float32, -bound, bound)
    b = jax.random.uniform(k_b, (hidden_size,), jnp.float32, -bound, bound)
    gamma = jnp.ones((hidden_size,), jnp.float32)   # LayerNorm weight
    beta = jnp.zeros((hidden_size,), jnp.float32)   # LayerNorm bias

    ref = reference_forward(inp, hidden, w, b, gamma, beta)

    # f32 parameter path: exact match vs. the f32 reference.
    params_f32 = prepare_rnn_cell_params(w, b, gamma, beta, input_size,
                                         compute_dtype=jnp.float32)
    out_f32 = jax.block_until_ready(rnn_cell_forward(inp, hidden, params_f32))
    assert out_f32.shape == (B, hidden_size)
    assert jnp.allclose(out_f32, ref, atol=1e-5, rtol=1e-5)

    # bf16 matmul path (default): relaxed tolerance vs. the f32 reference.
    params_bf16 = prepare_rnn_cell_params(w, b, gamma, beta, input_size)
    out_bf16 = jax.block_until_ready(rnn_cell_forward(inp, hidden, params_bf16))
    assert out_bf16.shape == (B, hidden_size)
    assert jnp.allclose(out_bf16, ref, atol=5e-2, rtol=5e-2)

    # Partial last batch tile (B not a sublane multiple) — no host-side padding copies.
    out_p = jax.block_until_ready(rnn_cell_forward(inp[:5], hidden[:5], params_f32))
    ref_p = reference_forward(inp[:5], hidden[:5], w, b, gamma, beta)
    assert out_p.shape == (5, hidden_size)
    assert jnp.allclose(out_p, ref_p, atol=1e-5, rtol=1e-5)

    # Multi-step grid path (exercises the >=2-grid-step / megacore heuristic).
    B2 = 20
    inp2 = jax.random.normal(jax.random.PRNGKey(1), (B2, input_size), dtype=jnp.float32)
    hid2 = jax.random.normal(jax.random.PRNGKey(2), (B2, hidden_size), dtype=jnp.float32)
    out2 = jax.block_until_ready(rnn_cell_forward(inp2, hid2, params_f32))
    ref2 = reference_forward(inp2, hid2, w, b, gamma, beta)
    assert out2.shape == (B2, hidden_size)
    assert jnp.allclose(out2, ref2, atol=1e-5, rtol=1e-5)

    print("KERNEL_OK")
</pallas_src>

<mosaic_0001>
module attributes {stable_mosaic.version = 11 : i64} {
  func.func @rnn_cell_kernel(%arg0: i32, %arg1: memref<8x32xf32, #tpu.memory_space<vmem>>, %arg2: memref<8x32xf32, #tpu.memory_space<vmem>>, %arg3: memref<32x128xf32, #tpu.memory_space<vmem>>, %arg4: memref<32x128xf32, #tpu.memory_space<vmem>>, %arg5: memref<1x128xf32, #tpu.memory_space<vmem>>, %arg6: memref<1x128xf32, #tpu.memory_space<vmem>>, %arg7: memref<1x128xf32, #tpu.memory_space<vmem>>, %arg8: memref<8x128xf32, #tpu.memory_space<vmem>>) attributes {dimension_semantics = [#tpu.dimension_semantics<parallel>], iteration_bounds = array<i64: 1>, scalar_prefetch = 0 : i64, scratch_operands = 0 : i64, tpu.core_type = #tpu.core_type<tc>, window_params = [{transform_indices = @transform_0, window_bounds = array<i64: 8, 32>}, {transform_indices = @transform_1, window_bounds = array<i64: 8, 32>}, {pipeline_mode = #tpu.pipeline_mode<synchronous>, transform_indices = @transform_2, window_bounds = array<i64: 32, 128>}, {pipeline_mode = #tpu.pipeline_mode<synchronous>, transform_indices = @transform_3, window_bounds = array<i64: 32, 128>}, {pipeline_mode = #tpu.pipeline_mode<synchronous>, transform_indices = @transform_4, window_bounds = array<i64: 1, 128>}, {pipeline_mode = #tpu.pipeline_mode<synchronous>, transform_indices = @transform_5, window_bounds = array<i64: 1, 128>}, {pipeline_mode = #tpu.pipeline_mode<synchronous>, transform_indices = @transform_6, window_bounds = array<i64: 1, 128>}, {transform_indices = @transform_7, window_bounds = array<i64: 8, 128>}]} {
    %c0 = arith.constant 0 : index
    %c0_0 = arith.constant 0 : index
    %0 = vector.load %arg1[%c0, %c0_0] : memref<8x32xf32, #tpu.memory_space<vmem>>, vector<8x32xf32>
    %c0_1 = arith.constant 0 : index
    %c0_2 = arith.constant 0 : index
    %1 = vector.load %arg2[%c0_1, %c0_2] : memref<8x32xf32, #tpu.memory_space<vmem>>, vector<8x32xf32>
    %c0_3 = arith.constant 0 : index
    %c0_4 = arith.constant 0 : index
    %2 = vector.load %arg3[%c0_3, %c0_4] : memref<32x128xf32, #tpu.memory_space<vmem>>, vector<32x128xf32>
    %cst = arith.constant dense<0.000000e+00> : vector<8x128xf32>
    %3 = tpu.matmul %0, %2, %cst {dimension_numbers = #tpu.dot_dimension_numbers<[1], [0], [0], [1], [0, 0, 1, 1], [], []>} : vector<8x32xf32>, vector<32x128xf32>, vector<8x128xf32> -> vector<8x128xf32>
    %c0_5 = arith.constant 0 : index
    %c0_6 = arith.constant 0 : index
    %4 = vector.load %arg4[%c0_5, %c0_6] : memref<32x128xf32, #tpu.memory_space<vmem>>, vector<32x128xf32>
    %cst_7 = arith.constant dense<0.000000e+00> : vector<8x128xf32>
    %5 = tpu.matmul %1, %4, %cst_7 {dimension_numbers = #tpu.dot_dimension_numbers<[1], [0], [0], [1], [0, 0, 1, 1], [], []>} : vector<8x32xf32>, vector<32x128xf32>, vector<8x128xf32> -> vector<8x128xf32>
    %6 = arith.addf %3, %5 : vector<8x128xf32>
    %c0_8 = arith.constant 0 : index
    %c0_9 = arith.constant 0 : index
    %7 = vector.load %arg5[%c0_8, %c0_9] : memref<1x128xf32, #tpu.memory_space<vmem>>, vector<1x128xf32>
    %8 = vector.broadcast %7 : vector<1x128xf32> to vector<8x128xf32>
    %9 = arith.addf %6, %8 : vector<8x128xf32>
    %cst_10 = arith.constant dense<0.000000e+00> : vector<8xf32>
    %10 = vector.multi_reduction <add>, %9, %cst_10 [1] : vector<8x128xf32> to vector<8xf32>
    %11 = vector.shape_cast %10 : vector<8xf32> to vector<8x1xf32>
    %12 = arith.mulf %9, %9 : vector<8x128xf32>
    %cst_11 = arith.constant dense<0.000000e+00> : vector<8xf32>
    %13 = vector.multi_reduction <add>, %12, %cst_11 [1] : vector<8x128xf32> to vector<8xf32>
    %14 = vector.shape_cast %13 : vector<8xf32> to vector<8x1xf32>
    %cst_12 = arith.constant 3.125000e-02 : f32
    %15 = vector.broadcast %cst_12 : f32 to vector<8x1xf32>
    %16 = arith.mulf %11, %15 : vector<8x1xf32>
    %cst_13 = arith.constant 3.125000e-02 : f32
    %17 = vector.broadcast %cst_13 : f32 to vector<8x1xf32>
    %18 = arith.mulf %14, %17 : vector<8x1xf32>
    %19 = arith.mulf %16, %16 : vector<8x1xf32>
    %20 = arith.subf %18, %19 : vector<8x1xf32>
    %cst_14 = arith.constant 0.000000e+00 : f32
    %21 = vector.broadcast %cst_14 : f32 to vector<8x1xf32>
    %22 = arith.maximumf %20, %21 : vector<8x1xf32>
    %23 = vector.broadcast %16 : vector<8x1xf32> to vector<8x128xf32>
    %24 = arith.subf %9, %23 : vector<8x128xf32>
    %cst_15 = arith.constant 9.99999974E-6 : f32
    %25 = vector.broadcast %cst_15 : f32 to vector<8x1xf32>
    %26 = arith.addf %22, %25 : vector<8x1xf32>
    %27 = math.rsqrt %26 : vector<8x1xf32>
    %28 = vector.broadcast %27 : vector<8x1xf32> to vector<8x128xf32>
    %29 = arith.mulf %24, %28 : vector<8x128xf32>
    %c0_16 = arith.constant 0 : index
    %c0_17 = arith.constant 0 : index
    %30 = vector.load %arg6[%c0_16, %c0_17] : memref<1x128xf32, #tpu.memory_space<vmem>>, vector<1x128xf32>
    %31 = vector.broadcast %30 : vector<1x128xf32> to vector<8x128xf32>
    %32 = arith.mulf %29, %31 : vector<8x128xf32>
    %c0_18 = arith.constant 0 : index
    %c0_19 = arith.constant 0 : index
    %33 = vector.load %arg7[%c0_18, %c0_19] : memref<1x128xf32, #tpu.memory_space<vmem>>, vector<1x128xf32>
    %34 = vector.broadcast %33 : vector<1x128xf32> to vector<8x128xf32>
    %35 = arith.addf %32, %34 : vector<8x128xf32>
    %cst_20 = arith.constant 0.000000e+00 : f32
    %36 = vector.broadcast %cst_20 : f32 to vector<8x128xf32>
    %37 = arith.maximumf %35, %36 : vector<8x128xf32>
    %c0_21 = arith.constant 0 : index
    %c0_22 = arith.constant 0 : index
    %38 = vector.load %arg8[%c0_21, %c0_22] : memref<8x128xf32, #tpu.memory_space<vmem>>, vector<8x128xf32>
    tpu.vector_store %arg8[%c0_21, %c0_22], %37 {strides = array<i32>} : memref<8x128xf32, #tpu.memory_space<vmem>>, vector<8x128xf32>,
    return
  }
  func.func @transform_0(%arg0: i32) -> (i32, i32) {
    %c0_i32 = arith.constant 0 : i32
    %c0_i32_0 = arith.constant 0 : i32
    return %arg0, %c0_i32 : i32, i32
  }
  func.func @transform_1(%arg0: i32) -> (i32, i32) {
    %c0_i32 = arith.constant 0 : i32
    %c0_i32_0 = arith.constant 0 : i32
    return %arg0, %c0_i32 : i32, i32
  }
  func.func @transform_2(%arg0: i32) -> (i32, i32) {
    %c0_i32 = arith.constant 0 : i32
    %c0_i32_0 = arith.constant 0 : i32
    %c0_i32_1 = arith.constant 0 : i32
    return %c0_i32, %c0_i32_0 : i32, i32
  }
  func.func @transform_3(%arg0: i32) -> (i32, i32) {
    %c0_i32 = arith.constant 0 : i32
    %c0_i32_0 = arith.constant 0 : i32
    %c0_i32_1 = arith.constant 0 : i32
    return %c0_i32, %c0_i32_0 : i32, i32
  }
  func.func @transform_4(%arg0: i32) -> (i32, i32) {
    %c0_i32 = arith.constant 0 : i32
    %c0_i32_0 = arith.constant 0 : i32
    %c0_i32_1 = arith.constant 0 : i32
    return %c0_i32, %c0_i32_0 : i32, i32
  }
  func.func @transform_5(%arg0: i32) -> (i32, i32) {
    %c0_i32 = arith.constant 0 : i32
    %c0_i32_0 = arith.constant 0 : i32
    %c0_i32_1 = arith.constant 0 : i32
    return %c0_i32, %c0_i32_0 : i32, i32
  }
  func.func @transform_6(%arg0: i32) -> (i32, i32) {
    %c0_i32 = arith.constant 0 : i32
    %c0_i32_0 = arith.constant 0 : i32
    %c0_i32_1 = arith.constant 0 : i32
    return %c0_i32, %c0_i32_0 : i32, i32
  }
  func.func @transform_7(%arg0: i32) -> (i32, i32) {
    %c0_i32 = arith.constant 0 : i32
    %c0_i32_0 = arith.constant 0 : i32
    return %arg0, %c0_i32 : i32, i32
  }
}

</mosaic_0001>

<llo_original>
// kernel: tpu_custom_call.1
$region0: #{tpu_custom_call.1}
  #allocation0 [shape = 'u32[]', space=smem, size = 0x4, offset = 0x4, fixed_abs, tag = 'smem constant byte address 0x4 - core index']
  #allocation1 [shape = 'u32[144,128]{1,0:T(1,128)}', space=vmem, size = 0x12000, scoped, tag = 'internal scratch']
  %s0 = inlined_call_operand.hbm [shape: f32[8,32], index: 0, kind: input, shape index: {}]
  %s1 = inlined_call_operand.hbm [shape: f32[8,32], index: 1, kind: input, shape index: {}]
  %s2 = inlined_call_operand.hbm [shape: f32[32,128], index: 2, kind: input, shape index: {}]
  %s3 = inlined_call_operand.hbm [shape: f32[32,128], index: 3, kind: input, shape index: {}]
  %s4 = inlined_call_operand.vmem [shape: f32[1,128], index: 4, kind: input, shape index: {}]
  %s5 = inlined_call_operand.vmem [shape: f32[1,128], index: 5, kind: input, shape index: {}]
  %s6 = inlined_call_operand.vmem [shape: f32[1,128], index: 6, kind: input, shape index: {}]
  %s7 = inlined_call_operand.hbm [shape: f32[8,128], index: 7, kind: output, shape index: {}]
  %s8 = sld [smem:[#allocation0]]
  $region54: #{tpu_custom_call.1} parent=0
    _
  %s10 = ssub.s32 1, %s8
  %s11 = scalar_select 0, %s10, %s8
  $region1: #{tpu_custom_call.1} parent=0
    #allocation2 [shape = 'u8[4096]{0}', space=vmem, size = 0x1000, scoped, tag = 'input window, operand 0, single buffered']
    #allocation3 [shape = 's32[1]{0}', space=sflag, size = 0x4, scoped, tag = 'scoped memory for tpu_custom_call.1']
    #allocation4 [shape = 's32[1]{0}', space=sflag, size = 0x4, scoped, tag = 'scoped memory for tpu_custom_call.1']
    #allocation5 [shape = 'u8[4096]{0}', space=vmem, size = 0x1000, scoped, tag = 'input window, operand 1, single buffered']
    #allocation6 [shape = 's32[1]{0}', space=sflag, size = 0x4, scoped, tag = 'scoped memory for tpu_custom_call.1']
    #allocation7 [shape = 'u8[16384]{0}', space=vmem, size = 0x4000, scoped, tag = 'input window, operand 2, single buffered']
    #allocation8 [shape = 'u8[16384]{0}', space=vmem, size = 0x4000, scoped, tag = 'input window, operand 3, single buffered']
    #allocation9 [shape = 's32[1]{0}', space=sflag, size = 0x4, scoped, tag = 'scoped memory for tpu_custom_call.1']
    #allocation10 [shape = 'u8[4096]{0}', space=vmem, size = 0x1000, scoped, tag = 'output window, operand 0, single buffered']
    %12 = vsyncpa [#allocation3], 0
    %13 = vsyncpa [#allocation6], 0
    %14 = vsyncpa [#allocation9], 0
    %15 = vsyncpa [#allocation4], 0
    // Predicated region
    $region2: #{tpu_custom_call.1} parent=1 // pred_check
      _
    $region3: #{tpu_custom_call.1} parent=1 // pred_check_branch
      %17 = sbr.rel (0) target = $region5
    $region4: #{tpu_custom_call.1} parent=1 // pred_region
      %s19 = ssub.s32 128, 128
      %20 = vsyncadd [#allocation3], %s19
      %s22 = sshll.u32 [#allocation2], 4
      %s23 = int_to_ptr.vmem [resolvable:$true] %s22
      %25 = dma.hbm_to_vmem [thread:$0]  %s0, 128, %s23, [#allocation3]
    $region5: #{tpu_custom_call.1} parent=1 // pred_fallthru
      _
    // Predicated region
    $region6: #{tpu_custom_call.1} parent=1 // pred_check
      _
    $region7: #{tpu_custom_call.1} parent=1 // pred_check_branch
      %27 = sbr.rel (0) target = $region9
    $region8: #{tpu_custom_call.1} parent=1 // pred_region
      %s29 = ssub.s32 128, 128
      %30 = vsyncadd [#allocation6], %s29
      %s32 = sshll.u32 [#allocation5], 4
      %s33 = int_to_ptr.vmem [resolvable:$true] %s32
      %35 = dma.hbm_to_vmem [thread:$0]  %s1, 128, %s33, [#allocation6]
    $region9: #{tpu_custom_call.1} parent=1 // pred_fallthru
      _
    // Predicated region
    $region10: #{tpu_custom_call.1} parent=1 // pred_check
      _
    $region11: #{tpu_custom_call.1} parent=1 // pred_check_branch
      %37 = sbr.rel (0) target = $region13
    $region12: #{tpu_custom_call.1} parent=1 // pred_region
      %s39 = ssub.s32 512, 512
      %40 = vsyncadd [#allocation6], %s39
      %s41 = sshll.u32 [#allocation7], 4
      %s42 = int_to_ptr.vmem [resolvable:$true] %s41
      %47 = dma.hbm_to_vmem [thread:$0]  %s2, 512, %s42, [#allocation6], 128, 128, 8
    $region13: #{tpu_custom_call.1} parent=1 // pred_fallthru
      _
    // Predicated region
    $region14: #{tpu_custom_call.1} parent=1 // pred_check
      _
    $region15: #{tpu_custom_call.1} parent=1 // pred_check_branch
      %49 = sbr.rel (0) target = $region17
    $region16: #{tpu_custom_call.1} parent=1 // pred_region
      %s51 = ssub.s32 512, 512
      %52 = vsyncadd [#allocation9], %s51
      %s53 = sshll.u32 [#allocation8], 4
      %s54 = int_to_ptr.vmem [resolvable:$true] %s53
      %59 = dma.hbm_to_vmem [thread:$0]  %s3, 512, %s54, [#allocation9], 128, 128, 8
    $region17: #{tpu_custom_call.1} parent=1 // pred_fallthru
      _
    // Predicated region
    $region18: #{tpu_custom_call.1} parent=1 // pred_check
      _
    $region19: #{tpu_custom_call.1} parent=1 // pred_check_branch
      %61 = sbr.rel (0) target = $region21
    $region20: #{tpu_custom_call.1} parent=1 // pred_region
      _
    $region21: #{tpu_custom_call.1} parent=1 // pred_fallthru
      _
    // Predicated region
    $region22: #{tpu_custom_call.1} parent=1 // pred_check
      _
    $region23: #{tpu_custom_call.1} parent=1 // pred_check_branch
      %63 = sbr.rel (0) target = $region25
    $region24: #{tpu_custom_call.1} parent=1 // pred_region
      _
    $region25: #{tpu_custom_call.1} parent=1 // pred_fallthru
      _
    // Predicated region
    $region26: #{tpu_custom_call.1} parent=1 // pred_check
      _
    $region27: #{tpu_custom_call.1} parent=1 // pred_check_branch
      %65 = sbr.rel (0) target = $region29
    $region28: #{tpu_custom_call.1} parent=1 // pred_region
      _
    $region29: #{tpu_custom_call.1} parent=1 // pred_fallthru
      _
    // Predicated region
    $region30: #{tpu_custom_call.1} parent=1 // pred_check
      _
    $region31: #{tpu_custom_call.1} parent=1 // pred_check_branch
      %67 = sbr.rel (0) target = $region33
    $region32: #{tpu_custom_call.1} parent=1 // pred_region
      %68 = dma.done [#allocation3], 128
    $region33: #{tpu_custom_call.1} parent=1 // pred_fallthru
      _
    // Predicated region
    $region34: #{tpu_custom_call.1} parent=1 // pred_check
      _
    $region35: #{tpu_custom_call.1} parent=1 // pred_check_branch
      %70 = sbr.rel (0) target = $region37
    $region36: #{tpu_custom_call.1} parent=1 // pred_region
      %71 = dma.done [#allocation6], 128
    $region37: #{tpu_custom_call.1} parent=1 // pred_fallthru
      _
    // Predicated region
    $region38: #{tpu_custom_call.1} parent=1 // pred_check
      _
    $region39: #{tpu_custom_call.1} parent=1 // pred_check_branch
      %73 = sbr.rel (0) target = $region41
    $region40: #{tpu_custom_call.1} parent=1 // pred_region
      %74 = dma.done [#allocation6], 512
    $region41: #{tpu_custom_call.1} parent=1 // pred_fallthru
      _
    // Predicated region
    $region42: #{tpu_custom_call.1} parent=1 // pred_check
      _
    $region43: #{tpu_custom_call.1} parent=1 // pred_check_branch
      %76 = sbr.rel (0) target = $region45
    $region44: #{tpu_custom_call.1} parent=1 // pred_region
      %77 = dma.done [#allocation9], 512
    $region45: #{tpu_custom_call.1} parent=1 // pred_fallthru
      _
    %v78 = vld [vmem:[#allocation2] sm:$0xff]
    %v79 = vld [vmem:[#allocation5] sm:$0xff]
    %v80 = vld [vmem:[#allocation7] sm:$0xff]
    %v81 = vld [vmem:[#allocation7 + $0x8] sm:$0xff]
    %v82 = vld [vmem:[#allocation7 + $0x10] sm:$0xff]
    %v83 = vld [vmem:[#allocation7 + $0x18] sm:$0xff]
    %v84 = vld [vmem:[#allocation8] sm:$0xff]
    %v85 = vld [vmem:[#allocation8 + $0x8] sm:$0xff]
    %v86 = vld [vmem:[#allocation8 + $0x10] sm:$0xff]
    %v87 = vld [vmem:[#allocation8 + $0x18] sm:$0xff]
    %vm88 = vcmask 261120
    %v90 = vsel %vm88, %v79, 0
    %92 = vmatprep.subr.mxu0 0.0
    %93 = vmatpush1.msra.mxu0 %v84
    %94 = vmatprep.subr.mxu0 0.0
    %95 = vmatpush1.msra.mxu0 %v85
    %96 = vmatprep.subr.mxu0 0.0
    %97 = vmatpush1.msra.mxu0 %v86
    %98 = vmatprep.subr.mxu0 0.0
    %99 = vmatpush1.msra.mxu0 %v87
    %100 = vmatprep.subr.mxu0 0.0
    %101 = vmatpush1.msra.mxu0 0.0
    %102 = vmatprep.subr.mxu0 0.0
    %103 = vmatpush1.msra.mxu0 0.0
    %104 = vmatprep.subr.mxu0 0.0
    %105 = vmatpush1.msra.mxu0 0.0
    %106 = vmatprep.subr.mxu0 0.0
    %107 = vmatpush1.msra.mxu0 0.0
    %108 = vmatprep.subr.mxu0 0.0
    %109 = vmatpush1.msra.mxu0 0.0
    %110 = vmatprep.subr.mxu0 0.0
    %111 = vmatpush1.msra.mxu0 0.0
    %112 = vmatprep.subr.mxu0 0.0
    %113 = vmatpush1.msra.mxu0 0.0
    %114 = vmatprep.subr.mxu0 0.0
    %115 = vmatpush1.msra.mxu0 0.0
    %116 = vmatprep.subr.mxu0 0.0
    %117 = vmatpush1.msra.mxu0 0.0
    %118 = vmatprep.subr.mxu0 0.0
    %119 = vmatpush1.msra.mxu0 0.0
    %120 = vmatprep.subr.mxu0 0.0
    %121 = vmatpush1.msra.mxu0 0.0
    %122 = vmatprep.subr.mxu0 0.0
    %123 = vmatpush1.msra.mxu0 0.0
    %124 = vmatprep.subr.mxu0 0.0
    %125 = vmatpush1.msra.mxu0 0.0
    %126 = vmatprep.subr.mxu0 0.0
    %127 = vmatpush1.msra.mxu0 0.0
    %128 = vmatprep.subr.mxu0 0.0
    %129 = vmatpush1.msra.mxu0 0.0
    %130 = vmatprep.subr.mxu0 0.0
    %131 = vmatpush1.msra.mxu0 0.0
    %132 = vmatprep.subr.mxu0 0.0
    %133 = vmatpush1.msra.mxu0 0.0
    %134 = vmatprep.subr.mxu0 0.0
    %135 = vmatpush1.msra.mxu0 0.0
    %136 = vmatprep.subr.mxu0 0.0
    %137 = vmatpush1.msra.mxu0 0.0
    %138 = vmatprep.subr.mxu0 0.0
    %139 = vmatpush1.msra.mxu0 0.0
    %140 = vmatprep.subr.mxu0 0.0
    %141 = vmatpush1.msra.mxu0 0.0
    %142 = vmatprep.subr.mxu0 0.0
    %143 = vmatpush1.msra.mxu0 0.0
    %144 = vmatprep.subr.mxu0 0.0
    %145 = vmatpush1.msra.mxu0 0.0
    %146 = vmatprep.subr.mxu0 0.0
    %147 = vmatpush1.msra.mxu0 0.0
    %148 = vmatprep.subr.mxu0 0.0
    %149 = vmatpush1.msra.mxu0 0.0
    %150 = vmatprep.subr.mxu0 0.0
    %151 = vmatpush1.msra.mxu0 0.0
    %152 = vmatprep.subr.mxu0 0.0
    %153 = vmatpush1.msra.mxu0 0.0
    %154 = vmatprep.subr.mxu0 0.0
    %155 = vmatpush1.msra.mxu0 0.0
    %156 = vmatprep.mubr.f32.mxu0 0.0
    %157 = vmatmul.mubr.f32.gmra.mrb[0].mxu0 %v90
    %v158 = vpop.f32.mrb[0].mxu0
    %v159 = vadd.f32 0.0, %v158
    %v160 = vpop.f32.mrb[0].mxu0
    %161 = vdwg.mxu0
    %v163 = vsel %vm88, %v78, 0
    %165 = vmatprep.subr.mxu0 0.0
    %166 = vmatpush1.msra.mxu0 %v80
    %167 = vmatprep.subr.mxu0 0.0
    %168 = vmatpush1.msra.mxu0 %v81
    %169 = vmatprep.subr.mxu0 0.0
    %170 = vmatpush1.msra.mxu0 %v82
    %171 = vmatprep.subr.mxu0 0.0
    %172 = vmatpush1.msra.mxu0 %v83
    %173 = vmatprep.subr.mxu0 0.0
    %174 = vmatpush1.msra.mxu0 0.0
    %175 = vmatprep.subr.mxu0 0.0
    %176 = vmatpush1.msra.mxu0 0.0
    %177 = vmatprep.subr.mxu0 0.0
    %178 = vmatpush1.msra.mxu0 0.0
    %179 = vmatprep.subr.mxu0 0.0
    %180 = vmatpush1.msra.mxu0 0.0
    %181 = vmatprep.subr.mxu0 0.0
    %182 = vmatpush1.msra.mxu0 0.0
    %183 = vmatprep.subr.mxu0 0.0
    %184 = vmatpush1.msra.mxu0 0.0
    %185 = vmatprep.subr.mxu0 0.0
    %186 = vmatpush1.msra.mxu0 0.0
    %187 = vmatprep.subr.mxu0 0.0
    %188 = vmatpush1.msra.mxu0 0.0
    %189 = vmatprep.subr.mxu0 0.0
    %190 = vmatpush1.msra.mxu0 0.0
    %191 = vmatprep.subr.mxu0 0.0
    %192 = vmatpush1.msra.mxu0 0.0
    %193 = vmatprep.subr.mxu0 0.0
    %194 = vmatpush1.msra.mxu0 0.0
    %195 = vmatprep.subr.mxu0 0.0
    %196 = vmatpush1.msra.mxu0 0.0
    %197 = vmatprep.subr.mxu0 0.0
    %198 = vmatpush1.msra.mxu0 0.0
    %199 = vmatprep.subr.mxu0 0.0
    %200 = vmatpush1.msra.mxu0 0.0
    %201 = vmatprep.subr.mxu0 0.0
    %202 = vmatpush1.msra.mxu0 0.0
    %203 = vmatprep.subr.mxu0 0.0
    %204 = vmatpush1.msra.mxu0 0.0
    %205 = vmatprep.subr.mxu0 0.0
    %206 = vmatpush1.msra.mxu0 0.0
    %207 = vmatprep.subr.mxu0 0.0
    %208 = vmatpush1.msra.mxu0 0.0
    %209 = vmatprep.subr.mxu0 0.0
    %210 = vmatpush1.msra.mxu0 0.0
    %211 = vmatprep.subr.mxu0 0.0
    %212 = vmatpush1.msra.mxu0 0.0
    %213 = vmatprep.subr.mxu0 0.0
    %214 = vmatpush1.msra.mxu0 0.0
    %215 = vmatprep.subr.mxu0 0.0
    %216 = vmatpush1.msra.mxu0 0.0
    %217 = vmatprep.subr.mxu0 0.0
    %218 = vmatpush1.msra.mxu0 0.0
    %219 = vmatprep.subr.mxu0 0.0
    %220 = vmatpush1.msra.mxu0 0.0
    %221 = vmatprep.subr.mxu0 0.0
    %222 = vmatpush1.msra.mxu0 0.0
    %223 = vmatprep.subr.mxu0 0.0
    %224 = vmatpush1.msra.mxu0 0.0
    %225 = vmatprep.subr.mxu0 0.0
    %226 = vmatpush1.msra.mxu0 0.0
    %227 = vmatprep.subr.mxu0 0.0
    %228 = vmatpush1.msra.mxu0 0.0
    %229 = vmatprep.mubr.f32.mxu0 0.0
    %230 = vmatmul.mubr.f32.gmra.mrb[0].mxu0 %v163
    %v231 = vpop.f32.mrb[0].mxu0
    %v232 = vadd.f32 %v159, %v231
    %v233 = vpop.f32.mrb[0].mxu0
    %234 = vdwg.mxu0
    %v235 = vld [vmem:[%s4] sm:$0x1]
    %v237 = vlaneseq
    %v238 = vshrl.u32 %v237, 7
    %v239 = vsub.s32 0, %v238
    %v240 = vrot.slane %v235, %v239
    %v242 = vadd.f32 %v232, %v240
    %243 = vadd.xlane.f32.xlu0 %v242
    %v244 = vpop.xlane.xlu0 %243
    %v245 = vmul.f32 %v242, %v242
    %246 = vadd.xlane.f32.xlu0 %v245
    %v247 = vpop.xlane.xlu0 %246
    %v248 = vmul.f32 %v244, 0.03125
    %v249 = vmul.f32 %v247, 0.03125
    %v250 = vmul.f32 %v248, %v248
    %v251 = vsub.f32 %v249, %v250
    %v252 = vmax.f32 %v251, 0.0
    %v253 = vsub.f32 %v242, %v248
    %v254 = vadd.f32 %v252, 1e-05
    %v255 = vrsqrt.pop %v254
    %v256 = vmul.f32 %v253, %v255
    %v257 = vld [vmem:[%s5] sm:$0x1]
    %v259 = vlaneseq
    %v260 = vshrl.u32 %v259, 7
    %v261 = vsub.s32 0, %v260
    %v262 = vrot.slane %v257, %v261
    %v264 = vmul.f32 %v256, %v262
    %v265 = vld [vmem:[%s6] sm:$0x1]
    %v267 = vlaneseq
    %v268 = vshrl.u32 %v267, 7
    %v269 = vsub.s32 0, %v268
    %v270 = vrot.slane %v265, %v269
    %v272 = vadd.f32 %v264, %v270
    %v273 = vmax.f32 %v272, 0.0
    %274 = vst [vmem:[#allocation10] sm:$0xff] %v273
    // Predicated region
    $region46: #{tpu_custom_call.1} parent=1 // pred_check
      _
    $region47: #{tpu_custom_call.1} parent=1 // pred_check_branch
      %276 = sbr.rel (0) target = $region49
    $region48: #{tpu_custom_call.1} parent=1 // pred_region
      %s278 = ssub.s32 128, 128
      %279 = vsyncadd [#allocation4], %s278
      %s281 = sshll.u32 [#allocation10], 4
      %s282 = int_to_ptr.vmem [resolvable:$true] %s281
      %284 = dma.vmem_to_hbm [thread:$0]  %s282, 128, %s7, [#allocation4]
    $region49: #{tpu_custom_call.1} parent=1 // pred_fallthru
      _
    // Predicated region
    $region50: #{tpu_custom_call.1} parent=1 // pred_check
      _
    $region51: #{tpu_custom_call.1} parent=1 // pred_check_branch
      %286 = sbr.rel (0) target = $region53
    $region52: #{tpu_custom_call.1} parent=1 // pred_region
      %287 = dma.done [#allocation4], 128
    $region53: #{tpu_custom_call.1} parent=1 // pred_fallthru
      _
    %288 = vsyncpa [#allocation3], 1
    %289 = vsyncpa [#allocation6], 1
    %290 = vsyncpa [#allocation9], 1
    %291 = vsyncpa [#allocation4], 1

</llo_original>
